<compile_context>
chip_gen: v5e
topology: v5e:2x2
jax: 0.10.0
libtpu: 0.0.40
codegen_flags: <defaults>
</compile_context>

<pallas_src>
import functools

import jax
import jax.numpy as jnp
import numpy as np
from jax.experimental import pallas as pl
from jax.experimental.pallas import tpu as pltpu


# ----------------------------------------------------------------------------
# Helpers
# ----------------------------------------------------------------------------
def _round_up(v, m):
    return ((v + m - 1) // m) * m


def _plan_tiles(n, tile_m, tile_k):
    """Clamp tiles to 128-multiples that fit N; keep >=2 row tiles (v7x TCs)."""
    n_128 = _round_up(n, 128)
    tile_m = max(128, (min(tile_m, n_128) // 128) * 128)
    tile_k = max(128, (min(tile_k, n_128) // 128) * 128)
    # v7x has 2 TensorCores per chip: keep the "parallel" row-grid extent >= 2
    # so one core never idles.  No effect on v5e / v6e (single TC).
    if n_128 >= 256:
        tile_m = min(tile_m, max(128, ((n_128 // 2) // 128) * 128))
    n_m = _round_up(n, tile_m)   # padded output / adj rows
    n_k = _round_up(n, tile_k)   # padded contraction dim (adj cols, xw rows)
    return tile_m, tile_k, n_m, n_k


def _pick_xw_tile(n_k, din, dsize, cap_bytes=4 * 1024 * 1024, cap_rows=2048):
    """Largest 128-multiple dividing n_k, bounded by a ~4 MiB x-block cap."""
    rows_by_bytes = max(128, ((cap_bytes // max(din * dsize, 1)) // 128) * 128)
    cap = min(n_k, cap_rows, rows_by_bytes)
    best, t = 128, 128
    while t <= cap:
        if n_k % t == 0:
            best = t
        t += 128
    return best


def prepare_adjacency(adj, *, tile_m=512, tile_k=512,
                      compute_dtype=jnp.bfloat16):
    """Cast + pad adj once; reuse the result across layers / training steps."""
    n = adj.shape[0]
    _, _, n_m, n_k = _plan_tiles(n, tile_m, tile_k)
    adj = adj.astype(compute_dtype)
    pr, pc = n_m - adj.shape[0], n_k - adj.shape[1]
    if pr or pc:
        adj = jnp.pad(adj, ((0, pr), (0, pc)))
    return adj


# ----------------------------------------------------------------------------
# Kernels
# ----------------------------------------------------------------------------
def _xw_kernel(x_ref, w_ref, xw_ref):
    # One row-block of support = x @ W.  f32 MXU accumulation, compute-dtype
    # intermediate (feeds the second matmul).
    xw_ref[...] = jnp.dot(x_ref[...], w_ref[...],
                          preferred_element_type=jnp.float32
                          ).astype(xw_ref.dtype)


def _adj_xw_resident_kernel(adj_ref, xw_ref, b_ref, o_ref, *, tile_k):
    # out[i] = bias + sum_k adj[i, k] @ xw[k]; xw fully resident in VMEM.
    k = pl.program_id(1)

    @pl.when(k == 0)
    def _():
        o_ref[...] = jnp.broadcast_to(b_ref[...], o_ref.shape)

    start = pl.multiple_of(k * tile_k, tile_k)
    o_ref[...] += jnp.dot(adj_ref[...], xw_ref[pl.ds(start, tile_k), :],
                          preferred_element_type=jnp.float32)


def _adj_xw_stream_kernel(adj_ref, xw_ref, b_ref, o_ref):
    # Same contraction, but xw is streamed one (tile_k, dout_p) block per step.
    k = pl.program_id(1)

    @pl.when(k == 0)
    def _():
        o_ref[...] = jnp.broadcast_to(b_ref[...], o_ref.shape)

    o_ref[...] += jnp.dot(adj_ref[...], xw_ref[...],
                          preferred_element_type=jnp.float32)


# ----------------------------------------------------------------------------
# Wrapper
# ----------------------------------------------------------------------------
def graph_convolution(x, adj, weight, bias, *, tile_m=512, tile_k=512,
                      compute_dtype=jnp.bfloat16,
                      vmem_budget_bytes=48 * 1024 * 1024):
    """out = adj @ (x @ weight) + bias, via two Pallas TPU kernels.

    `adj` may be the raw (N, N) float32 adjacency or the output of
    prepare_adjacency() (padded, compute_dtype) to skip the per-call cast/pad.
    """
    n, din = x.shape
    dout = weight.shape[1]
    assert bias.shape == (dout,)

    f32 = jnp.float32
    dsize = jnp.dtype(compute_dtype).itemsize

    dout_p = _round_up(dout, 128)                       # lane-dense output
    tile_m, tile_k, n_m, n_k = _plan_tiles(n, tile_m, tile_k)
    assert adj.shape in ((n, n), (n_m, n_k)), adj.shape

    # ---- pad / cast inputs --------------------------------------------------
    x_p = jnp.pad(x.astype(compute_dtype), ((0, n_k - n), (0, 0)))
    w_p = jnp.pad(weight.astype(compute_dtype), ((0, 0), (0, dout_p - dout)))
    b_p = jnp.pad(bias.astype(f32).reshape(1, dout),
                  ((0, 0), (0, dout_p - dout)))
    if adj.shape == (n_m, n_k) and adj.dtype == compute_dtype:
        adj_p = adj                                     # pre-prepared: no pre-pass
    else:
        adj_p = jnp.pad(adj.astype(compute_dtype),
                        ((0, n_m - adj.shape[0]), (0, n_k - adj.shape[1])))

    # ---- kernel 1: support = x @ W  (one pass, large decoupled row tile) ----
    tile_xw = _pick_xw_tile(n_k, din, dsize)
    xw = pl.pallas_call(
        _xw_kernel,
        out_shape=jax.ShapeDtypeStruct((n_k, dout_p), compute_dtype),
        grid_spec=pltpu.PrefetchScalarGridSpec(
            num_scalar_prefetch=0,
            grid=(n_k // tile_xw,),
            in_specs=[
                pl.BlockSpec((tile_xw, din), lambda i: (i, 0)),
                pl.BlockSpec((din, dout_p), lambda i: (0, 0)),   # W resident
            ],
            out_specs=pl.BlockSpec((tile_xw, dout_p), lambda i: (i, 0)),
        ),
        compiler_params=pltpu.CompilerParams(
            dimension_semantics=("parallel",),
            vmem_limit_bytes=32 * 1024 * 1024,
        ),
        cost_estimate=pl.CostEstimate(
            flops=2 * n_k * din * dout_p,
            transcendentals=0,
            bytes_accessed=(n_k * din + din * dout_p + n_k * dout_p) * dsize,
        ),
    )(x_p, w_p)

    # ---- kernel 2: out = adj @ support + bias (rows parallel, K innermost) --
    # Make xw fully VMEM-resident when the (2x-buffered) footprint fits the
    # budget; this removes all xw re-reads from HBM.
    resident_footprint = (2 * n_k * dout_p * dsize        # xw
                          + 2 * tile_m * tile_k * dsize   # adj double buffer
                          + 2 * tile_m * dout_p * 4       # out double buffer
                          + 2 * dout_p * 4)               # bias
    xw_resident = resident_footprint <= vmem_budget_bytes

    if xw_resident:
        kernel2 = functools.partial(_adj_xw_resident_kernel, tile_k=tile_k)
        xw_spec = pl.BlockSpec((n_k, dout_p), lambda i, k: (0, 0))
        xw_passes = 1
    else:
        kernel2 = _adj_xw_stream_kernel
        xw_spec = pl.BlockSpec((tile_k, dout_p), lambda i, k: (k, 0))
        xw_passes = n_m // tile_m                          # re-read per row tile

    out_p = pl.pallas_call(
        kernel2,
        out_shape=jax.ShapeDtypeStruct((n_m, dout_p), f32),
        grid_spec=pltpu.PrefetchScalarGridSpec(
            num_scalar_prefetch=0,
            grid=(n_m // tile_m, n_k // tile_k),           # reduction axis last
            in_specs=[
                pl.BlockSpec((tile_m, tile_k), lambda i, k: (i, k)),   # adj
                xw_spec,                                               # xw
                pl.BlockSpec((1, dout_p), lambda i, k: (0, 0)),        # bias
            ],
            out_specs=pl.BlockSpec((tile_m, dout_p), lambda i, k: (i, 0)),
        ),
        compiler_params=pltpu.CompilerParams(
            dimension_semantics=("parallel", "arbitrary"),
            vmem_limit_bytes=vmem_budget_bytes,            # <= v7x 64 MiB/TC
        ),
        cost_estimate=pl.CostEstimate(
            flops=2 * n_m * n_k * dout_p,
            transcendentals=0,
            bytes_accessed=(n_m * n_k * dsize
                            + xw_passes * n_k * dout_p * dsize
                            + dout_p * 4
                            + n_m * dout_p * 4),
        ),
    )(adj_p, xw, b_p)

    return out_p[:n, :dout]


# ----------------------------------------------------------------------------
# Demo / correctness check
# ----------------------------------------------------------------------------
if __name__ == "__main__":
    key = jax.random.PRNGKey(0)
    k_x, k_w, k_b, k_adj = jax.random.split(key, 4)

    # Small GCN-like shapes: N nodes, Din input features, Dout output features.
    N, Din, Dout = 256, 128, 64

    x = jax.random.normal(k_x, (N, Din), dtype=jnp.float32)

    # PyTorch reset_parameters equivalent: uniform(-1/sqrt(Dout), 1/sqrt(Dout)).
    stdv = 1.0 / np.sqrt(Dout)
    weight = jax.random.uniform(k_w, (Din, Dout), dtype=jnp.float32,
                                minval=-stdv, maxval=stdv)
    # Module inits bias to 0; use a nonzero bias to exercise the add path.
    bias = jax.random.uniform(k_b, (Dout,), dtype=jnp.float32,
                              minval=-stdv, maxval=stdv)

    # Deterministic dense, row-normalized adjacency with self-loops.
    adj_raw = (jax.random.uniform(k_adj, (N, N)) < 0.05).astype(jnp.float32)
    adj_raw = adj_raw + jnp.eye(N, dtype=jnp.float32)
    adj = adj_raw / jnp.sum(adj_raw, axis=1, keepdims=True)

    # 128-tiles at this small N so the demo exercises both grid axes, the
    # bias-init / k-accumulation path and the resident-xw dynamic slice.
    # (Real sizes should use the 512-tile defaults.)
    adj_prep = prepare_adjacency(adj, tile_m=128, tile_k=128)   # cached cast/pad
    out = graph_convolution(x, adj_prep, weight, bias, tile_m=128, tile_k=128)
    out = jax.block_until_ready(out)

    # Reference in plain f32 JAX (bf16 kernel inputs -> looser tolerance).
    ref = adj @ (x @ weight) + bias
    np.testing.assert_allclose(np.asarray(out), np.asarray(ref),
                               rtol=2e-2, atol=2e-2)

    print("KERNEL_OK")
</pallas_src>

<mosaic_0001>
module attributes {stable_mosaic.version = 11 : i64} {
  func.func @_xw_kernel(%arg0: i32, %arg1: memref<256x128xbf16, #tpu.memory_space<vmem>>, %arg2: memref<128x128xbf16, #tpu.memory_space<vmem>>, %arg3: memref<256x128xbf16, #tpu.memory_space<vmem>>) attributes {dimension_semantics = [#tpu.dimension_semantics<parallel>], iteration_bounds = array<i64: 1>, scalar_prefetch = 0 : i64, scratch_operands = 0 : i64, tpu.core_type = #tpu.core_type<tc>, window_params = [{transform_indices = @transform_0, window_bounds = array<i64: 256, 128>}, {pipeline_mode = #tpu.pipeline_mode<synchronous>, transform_indices = @transform_1, window_bounds = array<i64: 128, 128>}, {transform_indices = @transform_2, window_bounds = array<i64: 256, 128>}]} {
    %c0 = arith.constant 0 : index
    %c0_0 = arith.constant 0 : index
    %0 = vector.load %arg1[%c0, %c0_0] : memref<256x128xbf16, #tpu.memory_space<vmem>>, vector<256x128xbf16>
    %c0_1 = arith.constant 0 : index
    %c0_2 = arith.constant 0 : index
    %1 = vector.load %arg2[%c0_1, %c0_2] : memref<128x128xbf16, #tpu.memory_space<vmem>>, vector<128x128xbf16>
    %cst = arith.constant dense<0.000000e+00> : vector<256x128xf32>
    %2 = tpu.matmul %0, %1, %cst {dimension_numbers = #tpu.dot_dimension_numbers<[1], [0], [0], [1], [0, 0, 1, 1], [], []>} : vector<256x128xbf16>, vector<128x128xbf16>, vector<256x128xf32> -> vector<256x128xf32>
    %3 = arith.truncf %2 : vector<256x128xf32> to vector<256x128xbf16>
    %c0_3 = arith.constant 0 : index
    %c0_4 = arith.constant 0 : index
    %4 = vector.load %arg3[%c0_3, %c0_4] : memref<256x128xbf16, #tpu.memory_space<vmem>>, vector<256x128xbf16>
    tpu.vector_store %arg3[%c0_3, %c0_4], %3 {strides = array<i32>} : memref<256x128xbf16, #tpu.memory_space<vmem>>, vector<256x128xbf16>,
    return
  }
  func.func @transform_0(%arg0: i32) -> (i32, i32) {
    %c0_i32 = arith.constant 0 : i32
    %c0_i32_0 = arith.constant 0 : i32
    return %arg0, %c0_i32 : i32, i32
  }
  func.func @transform_1(%arg0: i32) -> (i32, i32) {
    %c0_i32 = arith.constant 0 : i32
    %c0_i32_0 = arith.constant 0 : i32
    %c0_i32_1 = arith.constant 0 : i32
    return %c0_i32, %c0_i32_0 : i32, i32
  }
  func.func @transform_2(%arg0: i32) -> (i32, i32) {
    %c0_i32 = arith.constant 0 : i32
    %c0_i32_0 = arith.constant 0 : i32
    return %arg0, %c0_i32 : i32, i32
  }
}

</mosaic_0001>

<llo_original>
// kernel: tpu_custom_call.1
$region0: #{tpu_custom_call.1}
  #allocation0 [shape = 'u32[]', space=smem, size = 0x4, offset = 0x4, fixed_abs, tag = 'smem constant byte address 0x4 - core index']
  #allocation1 [shape = 'u32[72,128]{1,0:T(1,128)}', space=vmem, size = 0x9000, scoped, tag = 'internal scratch']
  %s0 = inlined_call_operand.hbm [shape: bf16[256,128], index: 0, kind: input, shape index: {}]
  %s1 = inlined_call_operand.hbm [shape: bf16[128,128], index: 1, kind: input, shape index: {}]
  %s2 = inlined_call_operand.hbm [shape: bf16[256,128], index: 2, kind: output, shape index: {}]
  %s3 = sld [smem:[#allocation0]]
  $region26: #{tpu_custom_call.1} parent=0
    _
  %s5 = ssub.s32 1, %s3
  %s6 = scalar_select 0, %s5, %s3
  $region1: #{tpu_custom_call.1} parent=0
    #allocation2 [shape = 'u8[65536]{0}', space=vmem, size = 0x10000, scoped, tag = 'input window, operand 0, single buffered']
    #allocation3 [shape = 's32[1]{0}', space=sflag, size = 0x4, scoped, tag = 'scoped memory for tpu_custom_call.1']
    #allocation4 [shape = 's32[1]{0}', space=sflag, size = 0x4, scoped, tag = 'scoped memory for tpu_custom_call.1']
    #allocation5 [shape = 'u8[32768]{0}', space=vmem, size = 0x8000, scoped, tag = 'input window, operand 1, single buffered']
    #allocation6 [shape = 's32[1]{0}', space=sflag, size = 0x4, scoped, tag = 'scoped memory for tpu_custom_call.1']
    #allocation7 [shape = 'u8[65536]{0}', space=vmem, size = 0x10000, scoped, tag = 'output window, operand 0, single buffered']
    %7 = vsyncpa [#allocation3], 0
    %8 = vsyncpa [#allocation6], 0
    %9 = vsyncpa [#allocation4], 0
    // Predicated region
    $region2: #{tpu_custom_call.1} parent=1 // pred_check
      _
    $region3: #{tpu_custom_call.1} parent=1 // pred_check_branch
      %11 = sbr.rel (0) target = $region5
    $region4: #{tpu_custom_call.1} parent=1 // pred_region
      %13 = vsyncadd [#allocation3], 0
      %s14 = sshll.u32 %s0, 4
      %s15 = int_to_ptr.hbm [resolvable:$true] %s14
      %s16 = sshll.u32 [#allocation2], 4
      %s17 = int_to_ptr.vmem [resolvable:$true] %s16
      %22 = dma.hbm_to_vmem [thread:$0]  %s15, 2048, %s17, [#allocation3], 64, 64, 4
    $region5: #{tpu_custom_call.1} parent=1 // pred_fallthru
      _
    // Predicated region
    $region6: #{tpu_custom_call.1} parent=1 // pred_check
      _
    $region7: #{tpu_custom_call.1} parent=1 // pred_check_branch
      %24 = sbr.rel (0) target = $region9
    $region8: #{tpu_custom_call.1} parent=1 // pred_region
      %26 = vsyncadd [#allocation6], 0
      %s27 = sshll.u32 %s1, 4
      %s28 = int_to_ptr.hbm [resolvable:$true] %s27
      %s29 = sshll.u32 [#allocation5], 4
      %s30 = int_to_ptr.vmem [resolvable:$true] %s29
      %35 = dma.hbm_to_vmem [thread:$0]  %s28, 1024, %s30, [#allocation6], 64, 64, 4
    $region9: #{tpu_custom_call.1} parent=1 // pred_fallthru
      _
    // Predicated region
    $region10: #{tpu_custom_call.1} parent=1 // pred_check
      _
    $region11: #{tpu_custom_call.1} parent=1 // pred_check_branch
      %37 = sbr.rel (0) target = $region13
    $region12: #{tpu_custom_call.1} parent=1 // pred_region
      %39 = dma.done [#allocation3], 2048
    $region13: #{tpu_custom_call.1} parent=1 // pred_fallthru
      _
    // Predicated region
    $region14: #{tpu_custom_call.1} parent=1 // pred_check
      _
    $region15: #{tpu_custom_call.1} parent=1 // pred_check_branch
      %41 = sbr.rel (0) target = $region17
    $region16: #{tpu_custom_call.1} parent=1 // pred_region
      %43 = dma.done [#allocation6], 1024
    $region17: #{tpu_custom_call.1} parent=1 // pred_fallthru
      _
    %v44 = vld [vmem:[#allocation2] sm:$0xf]
    %v45 = vld [vmem:[#allocation2 + $0x4] sm:$0xf]
    %v46 = vld [vmem:[#allocation2 + $0x8] sm:$0xf]
    %v47 = vld [vmem:[#allocation2 + $0xc] sm:$0xf]
    %v48 = vld [vmem:[#allocation2 + $0x10] sm:$0xf]
    %v49 = vld [vmem:[#allocation2 + $0x14] sm:$0xf]
    %v50 = vld [vmem:[#allocation2 + $0x18] sm:$0xf]
    %v51 = vld [vmem:[#allocation2 + $0x1c] sm:$0xf]
    %v52 = vld [vmem:[#allocation2 + $0x20] sm:$0xf]
    %v53 = vld [vmem:[#allocation2 + $0x24] sm:$0xf]
    %v54 = vld [vmem:[#allocation2 + $0x28] sm:$0xf]
    %v55 = vld [vmem:[#allocation2 + $0x2c] sm:$0xf]
    %v56 = vld [vmem:[#allocation2 + $0x30] sm:$0xf]
    %v57 = vld [vmem:[#allocation2 + $0x34] sm:$0xf]
    %v58 = vld [vmem:[#allocation2 + $0x38] sm:$0xf]
    %v59 = vld [vmem:[#allocation2 + $0x3c] sm:$0xf]
    %v60 = vld [vmem:[#allocation2 + $0x40] sm:$0xf]
    %v61 = vld [vmem:[#allocation2 + $0x44] sm:$0xf]
    %v62 = vld [vmem:[#allocation2 + $0x48] sm:$0xf]
    %v63 = vld [vmem:[#allocation2 + $0x4c] sm:$0xf]
    %v64 = vld [vmem:[#allocation2 + $0x50] sm:$0xf]
    %v65 = vld [vmem:[#allocation2 + $0x54] sm:$0xf]
    %v66 = vld [vmem:[#allocation2 + $0x58] sm:$0xf]
    %v67 = vld [vmem:[#allocation2 + $0x5c] sm:$0xf]
    %v68 = vld [vmem:[#allocation2 + $0x60] sm:$0xf]
    %v69 = vld [vmem:[#allocation2 + $0x64] sm:$0xf]
    %v70 = vld [vmem:[#allocation2 + $0x68] sm:$0xf]
    %v71 = vld [vmem:[#allocation2 + $0x6c] sm:$0xf]
    %v72 = vld [vmem:[#allocation2 + $0x70] sm:$0xf]
    %v73 = vld [vmem:[#allocation2 + $0x74] sm:$0xf]
    %v74 = vld [vmem:[#allocation2 + $0x78] sm:$0xf]
    %v75 = vld [vmem:[#allocation2 + $0x7c] sm:$0xf]
    %v76 = vld [vmem:[#allocation5] sm:$0xf]
    %v77 = vld [vmem:[#allocation5 + $0x4] sm:$0xf]
    %v78 = vld [vmem:[#allocation5 + $0x8] sm:$0xf]
    %v79 = vld [vmem:[#allocation5 + $0xc] sm:$0xf]
    %v80 = vld [vmem:[#allocation5 + $0x10] sm:$0xf]
    %v81 = vld [vmem:[#allocation5 + $0x14] sm:$0xf]
    %v82 = vld [vmem:[#allocation5 + $0x18] sm:$0xf]
    %v83 = vld [vmem:[#allocation5 + $0x1c] sm:$0xf]
    %v84 = vld [vmem:[#allocation5 + $0x20] sm:$0xf]
    %v85 = vld [vmem:[#allocation5 + $0x24] sm:$0xf]
    %v86 = vld [vmem:[#allocation5 + $0x28] sm:$0xf]
    %v87 = vld [vmem:[#allocation5 + $0x2c] sm:$0xf]
    %v88 = vld [vmem:[#allocation5 + $0x30] sm:$0xf]
    %v89 = vld [vmem:[#allocation5 + $0x34] sm:$0xf]
    %v90 = vld [vmem:[#allocation5 + $0x38] sm:$0xf]
    %v91 = vld [vmem:[#allocation5 + $0x3c] sm:$0xf]
    %v124 = vunpack.c.l.b16 %v44
    %v125 = vunpack.c.l.b16 %v45
    %v126 = vunpack.c.l.b16 %v46
    %v127 = vunpack.c.l.b16 %v47
    %v128 = vunpack.c.l.b16 %v48
    %v129 = vunpack.c.l.b16 %v49
    %v130 = vunpack.c.l.b16 %v50
    %v131 = vunpack.c.l.b16 %v51
    %v132 = vunpack.c.l.b16 %v52
    %v133 = vunpack.c.l.b16 %v53
    %v134 = vunpack.c.l.b16 %v54
    %v135 = vunpack.c.l.b16 %v55
    %v136 = vunpack.c.l.b16 %v56
    %v137 = vunpack.c.l.b16 %v57
    %v138 = vunpack.c.l.b16 %v58
    %v139 = vunpack.c.l.b16 %v59
    %v140 = vunpack.c.l.b16 %v60
    %v141 = vunpack.c.l.b16 %v61
    %v142 = vunpack.c.l.b16 %v62
    %v143 = vunpack.c.l.b16 %v63
    %v144 = vunpack.c.l.b16 %v64
    %v145 = vunpack.c.l.b16 %v65
    %v146 = vunpack.c.l.b16 %v66
    %v147 = vunpack.c.l.b16 %v67
    %v148 = vunpack.c.l.b16 %v68
    %v149 = vunpack.c.l.b16 %v69
    %v150 = vunpack.c.l.b16 %v70
    %v151 = vunpack.c.l.b16 %v71
    %v152 = vunpack.c.l.b16 %v72
    %v153 = vunpack.c.l.b16 %v73
    %v154 = vunpack.c.l.b16 %v74
    %v155 = vunpack.c.l.b16 %v75
    %v156 = vpack.c.b16 %v125, %v124
    %v157 = vpack.c.b16 %v127, %v126
    %v158 = vpack.c.b16 %v129, %v128
    %v159 = vpack.c.b16 %v131, %v130
    %v160 = vpack.c.b16 %v133, %v132
    %v161 = vpack.c.b16 %v135, %v134
    %v162 = vpack.c.b16 %v137, %v136
    %v163 = vpack.c.b16 %v139, %v138
    %v164 = vpack.c.b16 %v141, %v140
    %v165 = vpack.c.b16 %v143, %v142
    %v166 = vpack.c.b16 %v145, %v144
    %v167 = vpack.c.b16 %v147, %v146
    %v168 = vpack.c.b16 %v149, %v148
    %v169 = vpack.c.b16 %v151, %v150
    %v170 = vpack.c.b16 %v153, %v152
    %v171 = vpack.c.b16 %v155, %v154
    %v204 = vunpack.c.l.b16 %v76
    %v205 = vunpack.c.l.b16 %v77
    %v206 = vunpack.c.l.b16 %v78
    %v207 = vunpack.c.l.b16 %v79
    %v208 = vunpack.c.l.b16 %v80
    %v209 = vunpack.c.l.b16 %v81
    %v210 = vunpack.c.l.b16 %v82
    %v211 = vunpack.c.l.b16 %v83
    %v212 = vunpack.c.l.b16 %v84
    %v213 = vunpack.c.l.b16 %v85
    %v214 = vunpack.c.l.b16 %v86
    %v215 = vunpack.c.l.b16 %v87
    %v216 = vunpack.c.l.b16 %v88
    %v217 = vunpack.c.l.b16 %v89
    %v218 = vunpack.c.l.b16 %v90
    %v219 = vunpack.c.l.b16 %v91
    %v220 = vpack.c.b16 %v205, %v204
    %v221 = vpack.c.b16 %v207, %v206
    %v222 = vpack.c.b16 %v209, %v208
    %v223 = vpack.c.b16 %v211, %v210
    %v224 = vpack.c.b16 %v213, %v212
    %v225 = vpack.c.b16 %v215, %v214
    %v226 = vpack.c.b16 %v217, %v216
    %v227 = vpack.c.b16 %v219, %v218
    %236 = vmatpush.bf16.msra.mxu0 %v227
    %237 = vmatpush.bf16.msra.mxu0 %v226
    %238 = vmatpush.bf16.msra.mxu0 %v225
    %239 = vmatpush.bf16.msra.mxu0 %v224
    %240 = vmatpush.bf16.msra.mxu0 %v223
    %241 = vmatpush.bf16.msra.mxu0 %v222
    %242 = vmatpush.bf16.msra.mxu0 %v221
    %243 = vmatpush.bf16.msra.mxu0 %v220
    %244 = vmatmul.bf16.gmra.mxu0 %v156
    %v245 = vpop.f32.mrf.mxu0
    %v246 = vadd.f32 0.0, %v245
    %v247 = vpop.f32.mrf.mxu0
    %v248 = vadd.f32 0.0, %v247
    %249 = vmatmul.bf16.gmra.mxu0 %v157
    %v250 = vpop.f32.mrf.mxu0
    %v251 = vadd.f32 0.0, %v250
    %v252 = vpop.f32.mrf.mxu0
    %v253 = vadd.f32 0.0, %v252
    %254 = vmatmul.bf16.gmra.mxu0 %v158
    %v255 = vpop.f32.mrf.mxu0
    %v256 = vadd.f32 0.0, %v255
    %v257 = vpop.f32.mrf.mxu0
    %v258 = vadd.f32 0.0, %v257
    %259 = vmatmul.bf16.gmra.mxu0 %v159
    %v260 = vpop.f32.mrf.mxu0
    %v261 = vadd.f32 0.0, %v260
    %v262 = vpop.f32.mrf.mxu0
    %v263 = vadd.f32 0.0, %v262
    %264 = vmatmul.bf16.gmra.mxu0 %v160
    %v265 = vpop.f32.mrf.mxu0
    %v266 = vadd.f32 0.0, %v265
    %v267 = vpop.f32.mrf.mxu0
    %v268 = vadd.f32 0.0, %v267
    %269 = vmatmul.bf16.gmra.mxu0 %v161
    %v270 = vpop.f32.mrf.mxu0
    %v271 = vadd.f32 0.0, %v270
    %v272 = vpop.f32.mrf.mxu0
    %v273 = vadd.f32 0.0, %v272
    %274 = vmatmul.bf16.gmra.mxu0 %v162
    %v275 = vpop.f32.mrf.mxu0
    %v276 = vadd.f32 0.0, %v275
    %v277 = vpop.f32.mrf.mxu0
    %v278 = vadd.f32 0.0, %v277
    %279 = vmatmul.bf16.gmra.mxu0 %v163
    %v280 = vpop.f32.mrf.mxu0
    %v281 = vadd.f32 0.0, %v280
    %v282 = vpop.f32.mrf.mxu0
    %v283 = vadd.f32 0.0, %v282
    %284 = vmatmul.bf16.gmra.mxu0 %v164
    %v285 = vpop.f32.mrf.mxu0
    %v286 = vadd.f32 0.0, %v285
    %v287 = vpop.f32.mrf.mxu0
    %v288 = vadd.f32 0.0, %v287
    %289 = vmatmul.bf16.gmra.mxu0 %v165
    %v290 = vpop.f32.mrf.mxu0
    %v291 = vadd.f32 0.0, %v290
    %v292 = vpop.f32.mrf.mxu0
    %v293 = vadd.f32 0.0, %v292
    %294 = vmatmul.bf16.gmra.mxu0 %v166
    %v295 = vpop.f32.mrf.mxu0
    %v296 = vadd.f32 0.0, %v295
    %v297 = vpop.f32.mrf.mxu0
    %v298 = vadd.f32 0.0, %v297
    %299 = vmatmul.bf16.gmra.mxu0 %v167
    %v300 = vpop.f32.mrf.mxu0
    %v301 = vadd.f32 0.0, %v300
    %v302 = vpop.f32.mrf.mxu0
    %v303 = vadd.f32 0.0, %v302
    %304 = vmatmul.bf16.gmra.mxu0 %v168
    %v305 = vpop.f32.mrf.mxu0
    %v306 = vadd.f32 0.0, %v305
    %v307 = vpop.f32.mrf.mxu0
    %v308 = vadd.f32 0.0, %v307
    %309 = vmatmul.bf16.gmra.mxu0 %v169
    %v310 = vpop.f32.mrf.mxu0
    %v311 = vadd.f32 0.0, %v310
    %v312 = vpop.f32.mrf.mxu0
    %v313 = vadd.f32 0.0, %v312
    %314 = vmatmul.bf16.gmra.mxu0 %v170
    %v315 = vpop.f32.mrf.mxu0
    %v316 = vadd.f32 0.0, %v315
    %v317 = vpop.f32.mrf.mxu0
    %v318 = vadd.f32 0.0, %v317
    %319 = vmatmul.bf16.gmra.mxu0 %v171
    %v320 = vpop.f32.mrf.mxu0
    %v321 = vadd.f32 0.0, %v320
    %v322 = vpop.f32.mrf.mxu0
    %v323 = vadd.f32 0.0, %v322
    %324 = vdwg.mxu0
    %v325 = vpack.c.bf16 %v246, %v246
    %v326 = vpack.c.bf16 %v248, %v248
    %v327 = vpack.c.bf16 %v251, %v251
    %v328 = vpack.c.bf16 %v253, %v253
    %v329 = vpack.c.bf16 %v256, %v256
    %v330 = vpack.c.bf16 %v258, %v258
    %v331 = vpack.c.bf16 %v261, %v261
    %v332 = vpack.c.bf16 %v263, %v263
    %v333 = vpack.c.bf16 %v266, %v266
    %v334 = vpack.c.bf16 %v268, %v268
    %v335 = vpack.c.bf16 %v271, %v271
    %v336 = vpack.c.bf16 %v273, %v273
    %v337 = vpack.c.bf16 %v276, %v276
    %v338 = vpack.c.bf16 %v278, %v278
    %v339 = vpack.c.bf16 %v281, %v281
    %v340 = vpack.c.bf16 %v283, %v283
    %v341 = vpack.c.bf16 %v286, %v286
    %v342 = vpack.c.bf16 %v288, %v288
    %v343 = vpack.c.bf16 %v291, %v291
    %v344 = vpack.c.bf16 %v293, %v293
    %v345 = vpack.c.bf16 %v296, %v296
    %v346 = vpack.c.bf16 %v298, %v298
    %v347 = vpack.c.bf16 %v301, %v301
    %v348 = vpack.c.bf16 %v303, %v303
    %v349 = vpack.c.bf16 %v306, %v306
    %v350 = vpack.c.bf16 %v308, %v308
    %v351 = vpack.c.bf16 %v311, %v311
    %v352 = vpack.c.bf16 %v313, %v313
    %v353 = vpack.c.bf16 %v316, %v316
    %v354 = vpack.c.bf16 %v318, %v318
    %v355 = vpack.c.bf16 %v321, %v321
    %v356 = vpack.c.bf16 %v323, %v323
    %357 = vst [vmem:[#allocation7] sm:$0xf] %v325
    %358 = vst [vmem:[#allocation7 + $0x4] sm:$0xf] %v326
    %359 = vst [vmem:[#allocation7 + $0x8] sm:$0xf] %v327
    %360 = vst [vmem:[#allocation7 + $0xc] sm:$0xf] %v328
    %361 = vst [vmem:[#allocation7 + $0x10] sm:$0xf] %v329
    %362 = vst [vmem:[#allocation7 + $0x14] sm:$0xf] %v330
    %363 = vst [vmem:[#allocation7 + $0x18] sm:$0xf] %v331
    %364 = vst [vmem:[#allocation7 + $0x1c] sm:$0xf] %v332
    %365 = vst [vmem:[#allocation7 + $0x20] sm:$0xf] %v333
    %366 = vst [vmem:[#allocation7 + $0x24] sm:$0xf] %v334
    %367 = vst [vmem:[#allocation7 + $0x28] sm:$0xf] %v335
    %368 = vst [vmem:[#allocation7 + $0x2c] sm:$0xf] %v336
    %369 = vst [vmem:[#allocation7 + $0x30] sm:$0xf] %v337
    %370 = vst [vmem:[#allocation7 + $0x34] sm:$0xf] %v338
    %371 = vst [vmem:[#allocation7 + $0x38] sm:$0xf] %v339
    %372 = vst [vmem:[#allocation7 + $0x3c] sm:$0xf] %v340
    %373 = vst [vmem:[#allocation7 + $0x40] sm:$0xf] %v341
    %374 = vst [vmem:[#allocation7 + $0x44] sm:$0xf] %v342
    %375 = vst [vmem:[#allocation7 + $0x48] sm:$0xf] %v343
    %376 = vst [vmem:[#allocation7 + $0x4c] sm:$0xf] %v344
    %377 = vst [vmem:[#allocation7 + $0x50] sm:$0xf] %v345
    %378 = vst [vmem:[#allocation7 + $0x54] sm:$0xf] %v346
    %379 = vst [vmem:[#allocation7 + $0x58] sm:$0xf] %v347
    %380 = vst [vmem:[#allocation7 + $0x5c] sm:$0xf] %v348
    %381 = vst [vmem:[#allocation7 + $0x60] sm:$0xf] %v349
    %382 = vst [vmem:[#allocation7 + $0x64] sm:$0xf] %v350
    %383 = vst [vmem:[#allocation7 + $0x68] sm:$0xf] %v351
    %384 = vst [vmem:[#allocation7 + $0x6c] sm:$0xf] %v352
    %385 = vst [vmem:[#allocation7 + $0x70] sm:$0xf] %v353
    %386 = vst [vmem:[#allocation7 + $0x74] sm:$0xf] %v354
    %387 = vst [vmem:[#allocation7 + $0x78] sm:$0xf] %v355
    %388 = vst [vmem:[#allocation7 + $0x7c] sm:$0xf] %v356
    // Predicated region
    $region18: #{tpu_custom_call.1} parent=1 // pred_check
      _
    $region19: #{tpu_custom_call.1} parent=1 // pred_check_branch
      %390 = sbr.rel (0) target = $region21
    $region20: #{tpu_custom_call.1} parent=1 // pred_region
      %392 = vsyncadd [#allocation4], 0
      %s393 = sshll.u32 [#allocation7], 4
      %s394 = int_to_ptr.vmem [resolvable:$true] %s393
      %s395 = sshll.u32 %s2, 4
      %s396 = int_to_ptr.hbm [resolvable:$true] %s395
      %401 = dma.vmem_to_hbm [thread:$0]  %s394, 2048, %s396, [#allocation4], 64, 64, 4
    $region21: #{tpu_custom_call.1} parent=1 // pred_fallthru
      _
    // Predicated region
    $region22: #{tpu_custom_call.1} parent=1 // pred_check
      _
    $region23: #{tpu_custom_call.1} parent=1 // pred_check_branch
      %403 = sbr.rel (0) target = $region25
    $region24: #{tpu_custom_call.1} parent=1 // pred_region
      %405 = dma.done [#allocation4], 2048
    $region25: #{tpu_custom_call.1} parent=1 // pred_fallthru
      _
    %406 = vsyncpa [#allocation3], 1
    %407 = vsyncpa [#allocation6], 1
    %408 = vsyncpa [#allocation4], 1

</llo_original>
